<compile_context>
chip_gen: v7x
topology: tpu7x:2x2x1
jax: 0.10.0
libtpu: 0.0.40
codegen_flags: <defaults>
</compile_context>

<pallas_src>
import math

import jax
import jax.numpy as jnp
from jax.experimental import pallas as pl
from jax.experimental.pallas import tpu as pltpu

_LANE = 128
_SUBLANE = 8
_NEG_FILL = -1e4  # sigmoid(-1e4) == 0 in f32, so logit padding is exact


def _dice_kernel(x_ref, t_ref, dice_ref, inter_acc, denom_acc):
    d = pl.program_id(1)

    @pl.when(d == 0)
    def _():
        inter_acc[...] = jnp.zeros_like(inter_acc)
        denom_acc[...] = jnp.zeros_like(denom_acc)

    x = x_ref[...].astype(jnp.float32)          # (R_block, 128) logits tile
    t = t_ref[...].astype(jnp.float32)          # (R_block, 128) target tile
    p = jax.nn.sigmoid(x)                       # EUP

    # Fold the tile into a single (8, 128) vreg accumulator with VPU adds only;
    # the cross-lane/sublane (XLU) reduce is deferred to the final step.
    inter_acc[...] += jnp.sum((p * t).reshape(-1, _SUBLANE, _LANE), axis=0)
    denom_acc[...] += jnp.sum((p + t).reshape(-1, _SUBLANE, _LANE), axis=0)

    @pl.when(d == pl.num_programs(1) - 1)
    def _():
        smooth = jnp.float32(1.0)
        inter = jnp.sum(inter_acc[...])          # one XLU reduce per sample
        denom = jnp.sum(denom_acc[...])
        dice = 2.0 * (inter + smooth) / (denom + smooth)
        dice_ref[...] = jnp.broadcast_to(dice, dice_ref.shape)


def _ceil_to(x: int, m: int) -> int:
    return -(-x // m) * m


def dice_loss(inputs: jax.Array, target: jax.Array, *,
              compute_dtype=jnp.bfloat16, max_block_rows: int = 8192) -> jax.Array:
    """DiceLoss.forward: inputs = logits [N, ...], target = 0/1 mask [N, ...]."""
    assert max_block_rows % _SUBLANE == 0
    N = target.shape[0]
    D = math.prod(inputs.shape[1:])

    # Halve HBM traffic (kernel upcasts to f32 and accumulates in f32).
    x2d = inputs.reshape(N, D).astype(compute_dtype)
    t2d = target.reshape(N, D).astype(compute_dtype)

    # Lane/sublane-dense layout [N, rows, 128] with rows a multiple of 8.
    rows = _ceil_to(_ceil_to(D, _LANE) // _LANE, _SUBLANE)
    if rows <= max_block_rows:
        r_block = rows
    else:
        r_block = max_block_rows
        rows = _ceil_to(rows, r_block)
    d_pad = rows * _LANE

    if d_pad != D:
        # Exact padding: sigmoid(-1e4) == 0 and target pad == 0 contribute
        # nothing to any of the accumulated sums.
        x2d = jnp.pad(x2d, ((0, 0), (0, d_pad - D)), constant_values=_NEG_FILL)
        t2d = jnp.pad(t2d, ((0, 0), (0, d_pad - D)), constant_values=0)

    x3d = x2d.reshape(N, rows, _LANE)
    t3d = t2d.reshape(N, rows, _LANE)
    grid = (N, rows // r_block)

    dice = pl.pallas_call(
        _dice_kernel,
        out_shape=jax.ShapeDtypeStruct((N, _SUBLANE, _LANE), jnp.float32),
        grid_spec=pltpu.PrefetchScalarGridSpec(
            num_scalar_prefetch=0,
            grid=grid,
            in_specs=[
                pl.BlockSpec((None, r_block, _LANE), lambda n, d: (n, d, 0)),
                pl.BlockSpec((None, r_block, _LANE), lambda n, d: (n, d, 0)),
            ],
            out_specs=pl.BlockSpec((None, _SUBLANE, _LANE),
                                   lambda n, d: (n, 0, 0)),
            scratch_shapes=[
                pltpu.VMEM((_SUBLANE, _LANE), jnp.float32),  # sum(sigmoid(x)*t)
                pltpu.VMEM((_SUBLANE, _LANE), jnp.float32),  # sum(sigmoid(x)+t)
            ],
        ),
        compiler_params=pltpu.CompilerParams(
            # N is independent (megacore-parallel on v7x); D is the reduction.
            dimension_semantics=("parallel", "arbitrary")),
    )(x3d, t3d)

    # Finish the mean over samples in JAX (race-free w.r.t. megacore).
    return 1.0 - jnp.sum(dice[:, 0, 0]) / N


def _dice_loss_ref(inputs, target):
    N = target.shape[0]
    smooth = 1.0
    p = jax.nn.sigmoid(inputs).reshape(N, -1)
    t = target.reshape(N, -1)
    inter = jnp.sum(p * t, axis=1)
    dice = 2.0 * (inter + smooth) / (jnp.sum(p, axis=1) + jnp.sum(t, axis=1) + smooth)
    return 1.0 - jnp.sum(dice) / N


if __name__ == "__main__":
    key = jax.random.PRNGKey(0)
    k1, k2 = jax.random.split(key)
    N, C, H, W = 2, 4, 16, 16
    x = jax.random.normal(k1, (N, C, H, W), dtype=jnp.float32)             # logits
    t = (jax.random.uniform(k2, (N, C, H, W)) > 0.5).astype(jnp.float32)   # 0/1 mask

    loss = jax.block_until_ready(dice_loss(x, t))

    # Reference on the same bf16-rounded logits (what the kernel consumes).
    ref_bf16 = jax.block_until_ready(
        _dice_loss_ref(x.astype(jnp.bfloat16).astype(jnp.float32), t))
    # Reference at full f32 (original PyTorch semantics).
    ref_f32 = jax.block_until_ready(_dice_loss_ref(x, t))

    assert jnp.allclose(loss, ref_bf16, atol=1e-4, rtol=1e-4), (loss, ref_bf16)
    assert jnp.allclose(loss, ref_f32, atol=5e-3, rtol=0.0), (loss, ref_f32)
    print("KERNEL_OK")
</pallas_src>

<mosaic_0001>
module attributes {stable_mosaic.version = 11 : i64} {
  func.func @_dice_kernel(%arg0: i32, %arg1: i32, %arg2: memref<1x8x128xbf16, #tpu.memory_space<vmem>>, %arg3: memref<1x8x128xbf16, #tpu.memory_space<vmem>>, %arg4: memref<1x8x128xf32, #tpu.memory_space<vmem>>, %arg5: memref<8x128xf32, #tpu.memory_space<vmem>>, %arg6: memref<8x128xf32, #tpu.memory_space<vmem>>) attributes {dimension_semantics = [#tpu.dimension_semantics<parallel>, #tpu.dimension_semantics<arbitrary>], iteration_bounds = array<i64: 2, 1>, scalar_prefetch = 0 : i64, scratch_operands = 2 : i64, tpu.core_type = #tpu.core_type<tc>, window_params = [{transform_indices = @transform_0, window_bounds = array<i64: 1, 8, 128>}, {transform_indices = @transform_1, window_bounds = array<i64: 1, 8, 128>}, {transform_indices = @transform_2, window_bounds = array<i64: 1, 8, 128>}]} {
    %c0_i32 = arith.constant 0 : i32
    %0 = arith.cmpi eq, %arg1, %c0_i32 : i32
    %1 = arith.extui %0 : i1 to i32
    %c0_i32_0 = arith.constant 0 : i32
    %2 = arith.cmpi ne, %1, %c0_i32_0 : i32
    scf.if %2 {
      %cst_18 = arith.constant 0.000000e+00 : f32
      %29 = vector.broadcast %cst_18 : f32 to vector<8x128xf32>
      %c0_19 = arith.constant 0 : index
      %c0_20 = arith.constant 0 : index
      %30 = vector.load %arg5[%c0_19, %c0_20] : memref<8x128xf32, #tpu.memory_space<vmem>>, vector<8x128xf32>
      tpu.vector_store %arg5[%c0_19, %c0_20], %29 {strides = array<i32>} : memref<8x128xf32, #tpu.memory_space<vmem>>, vector<8x128xf32>,
      %cst_21 = arith.constant 0.000000e+00 : f32
      %31 = vector.broadcast %cst_21 : f32 to vector<8x128xf32>
      %c0_22 = arith.constant 0 : index
      %c0_23 = arith.constant 0 : index
      %32 = vector.load %arg6[%c0_22, %c0_23] : memref<8x128xf32, #tpu.memory_space<vmem>>, vector<8x128xf32>
      tpu.vector_store %arg6[%c0_22, %c0_23], %31 {strides = array<i32>} : memref<8x128xf32, #tpu.memory_space<vmem>>, vector<8x128xf32>,
    } else {
    }
    %c0 = arith.constant 0 : index
    %c0_1 = arith.constant 0 : index
    %c0_2 = arith.constant 0 : index
    %3 = vector.load %arg2[%c0, %c0_1, %c0_2] : memref<1x8x128xbf16, #tpu.memory_space<vmem>>, vector<1x8x128xbf16>
    %4 = vector.shape_cast %3 : vector<1x8x128xbf16> to vector<8x128xbf16>
    %5 = arith.extf %4 : vector<8x128xbf16> to vector<8x128xf32>
    %c0_3 = arith.constant 0 : index
    %c0_4 = arith.constant 0 : index
    %c0_5 = arith.constant 0 : index
    %6 = vector.load %arg3[%c0_3, %c0_4, %c0_5] : memref<1x8x128xbf16, #tpu.memory_space<vmem>>, vector<1x8x128xbf16>
    %7 = vector.shape_cast %6 : vector<1x8x128xbf16> to vector<8x128xbf16>
    %8 = arith.extf %7 : vector<8x128xbf16> to vector<8x128xf32>
    %9 = arith.negf %5 : vector<8x128xf32>
    %10 = math.exp %9 : vector<8x128xf32>
    %cst = arith.constant 1.000000e+00 : f32
    %11 = vector.broadcast %cst : f32 to vector<8x128xf32>
    %12 = arith.addf %11, %10 : vector<8x128xf32>
    %13 = arith.divf %11, %12 : vector<8x128xf32>
    %c0_6 = arith.constant 0 : index
    %c0_7 = arith.constant 0 : index
    %14 = vector.load %arg5[%c0_6, %c0_7] : memref<8x128xf32, #tpu.memory_space<vmem>>, vector<8x128xf32>
    %15 = arith.mulf %13, %8 : vector<8x128xf32>
    %16 = vector.shape_cast %15 : vector<8x128xf32> to vector<1x8x128xf32>
    %cst_8 = arith.constant dense<0.000000e+00> : vector<8x128xf32>
    %17 = vector.multi_reduction <add>, %16, %cst_8 [0] : vector<1x8x128xf32> to vector<8x128xf32>
    %18 = arith.addf %14, %17 : vector<8x128xf32>
    %c0_9 = arith.constant 0 : index
    %c0_10 = arith.constant 0 : index
    %19 = vector.load %arg5[%c0_9, %c0_10] : memref<8x128xf32, #tpu.memory_space<vmem>>, vector<8x128xf32>
    tpu.vector_store %arg5[%c0_9, %c0_10], %18 {strides = array<i32>} : memref<8x128xf32, #tpu.memory_space<vmem>>, vector<8x128xf32>,
    %c0_11 = arith.constant 0 : index
    %c0_12 = arith.constant 0 : index
    %20 = vector.load %arg6[%c0_11, %c0_12] : memref<8x128xf32, #tpu.memory_space<vmem>>, vector<8x128xf32>
    %21 = arith.addf %13, %8 : vector<8x128xf32>
    %22 = vector.shape_cast %21 : vector<8x128xf32> to vector<1x8x128xf32>
    %cst_13 = arith.constant dense<0.000000e+00> : vector<8x128xf32>
    %23 = vector.multi_reduction <add>, %22, %cst_13 [0] : vector<1x8x128xf32> to vector<8x128xf32>
    %24 = arith.addf %20, %23 : vector<8x128xf32>
    %c0_14 = arith.constant 0 : index
    %c0_15 = arith.constant 0 : index
    %25 = vector.load %arg6[%c0_14, %c0_15] : memref<8x128xf32, #tpu.memory_space<vmem>>, vector<8x128xf32>
    tpu.vector_store %arg6[%c0_14, %c0_15], %24 {strides = array<i32>} : memref<8x128xf32, #tpu.memory_space<vmem>>, vector<8x128xf32>,
    %c0_i32_16 = arith.constant 0 : i32
    %26 = arith.cmpi eq, %arg1, %c0_i32_16 : i32
    %27 = arith.extui %26 : i1 to i32
    %c0_i32_17 = arith.constant 0 : i32
    %28 = arith.cmpi ne, %27, %c0_i32_17 : i32
    scf.if %28 {
      %c0_18 = arith.constant 0 : index
      %c0_19 = arith.constant 0 : index
      %29 = vector.load %arg5[%c0_18, %c0_19] : memref<8x128xf32, #tpu.memory_space<vmem>>, vector<8x128xf32>
      %30 = vector.shape_cast %29 : vector<8x128xf32> to vector<1x8x128xf32>
      %cst_20 = arith.constant dense<0.000000e+00> : vector<1xf32>
      %31 = vector.multi_reduction <add>, %30, %cst_20 [1, 2] : vector<1x8x128xf32> to vector<1xf32>
      %32 = vector.shape_cast %31 : vector<1xf32> to vector<1x1x1xf32>
      %33 = vector.extract %32[0, 0, 0] : f32 from vector<1x1x1xf32>
      %c0_21 = arith.constant 0 : index
      %c0_22 = arith.constant 0 : index
      %34 = vector.load %arg6[%c0_21, %c0_22] : memref<8x128xf32, #tpu.memory_space<vmem>>, vector<8x128xf32>
      %35 = vector.shape_cast %34 : vector<8x128xf32> to vector<1x8x128xf32>
      %cst_23 = arith.constant dense<0.000000e+00> : vector<1xf32>
      %36 = vector.multi_reduction <add>, %35, %cst_23 [1, 2] : vector<1x8x128xf32> to vector<1xf32>
      %37 = vector.shape_cast %36 : vector<1xf32> to vector<1x1x1xf32>
      %38 = vector.extract %37[0, 0, 0] : f32 from vector<1x1x1xf32>
      %cst_24 = arith.constant 1.000000e+00 : f32
      %39 = arith.addf %33, %cst_24 : f32
      %cst_25 = arith.constant 2.000000e+00 : f32
      %40 = arith.mulf %cst_25, %39 : f32
      %cst_26 = arith.constant 1.000000e+00 : f32
      %41 = arith.addf %38, %cst_26 : f32
      %42 = arith.divf %40, %41 : f32
      %43 = vector.broadcast %42 : f32 to vector<8x128xf32>
      %c0_27 = arith.constant 0 : index
      %c0_28 = arith.constant 0 : index
      %c0_29 = arith.constant 0 : index
      %44 = vector.load %arg4[%c0_27, %c0_28, %c0_29] : memref<1x8x128xf32, #tpu.memory_space<vmem>>, vector<1x8x128xf32>
      %45 = vector.shape_cast %44 : vector<1x8x128xf32> to vector<8x128xf32>
      %46 = vector.shape_cast %43 : vector<8x128xf32> to vector<1x8x128xf32>
      tpu.vector_store %arg4[%c0_27, %c0_28, %c0_29], %46 {strides = array<i32>} : memref<1x8x128xf32, #tpu.memory_space<vmem>>, vector<1x8x128xf32>,
    } else {
    }
    return
  }
  func.func @transform_0(%arg0: i32, %arg1: i32) -> (i32, i32, i32) {
    %c0_i32 = arith.constant 0 : i32
    %c0_i32_0 = arith.constant 0 : i32
    return %arg0, %arg1, %c0_i32 : i32, i32, i32
  }
  func.func @transform_1(%arg0: i32, %arg1: i32) -> (i32, i32, i32) {
    %c0_i32 = arith.constant 0 : i32
    %c0_i32_0 = arith.constant 0 : i32
    return %arg0, %arg1, %c0_i32 : i32, i32, i32
  }
  func.func @transform_2(%arg0: i32, %arg1: i32) -> (i32, i32, i32) {
    %c0_i32 = arith.constant 0 : i32
    %c0_i32_0 = arith.constant 0 : i32
    %c0_i32_1 = arith.constant 0 : i32
    return %arg0, %c0_i32, %c0_i32_0 : i32, i32, i32
  }
}

</mosaic_0001>

<llo_original>
// kernel: tpu_custom_call.1
$region0: #{tpu_custom_call.1}
  #allocation0 [shape = 'u32[]', space=smem, size = 0x4, offset = 0x4, fixed_abs, tag = 'smem constant byte address 0x4 - core index']
  #allocation1 [shape = 'u32[144,128]{1,0:T(1,128)}', space=vmem, size = 0x12000, scoped, tag = 'internal scratch']
  #allocation2 [shape = 'f32[8,128]{1,0:T(8,128)}', space=vmem, size = 0x1000, scoped, tag = 'scratch operand']
  #allocation3 [shape = 'f32[8,128]{1,0:T(8,128)}', space=vmem, size = 0x1000, scoped, tag = 'scratch operand']
  %s0 = inlined_call_operand.hbm [shape: bf16[2,8,128], index: 0, kind: input, shape index: {}]
  %s1 = inlined_call_operand.hbm [shape: bf16[2,8,128], index: 1, kind: input, shape index: {}]
  %s2 = inlined_call_operand.hbm [shape: f32[2,8,128], index: 2, kind: output, shape index: {}]
  %s3 = sld [smem:[#allocation0]]
  $region57: #{tpu_custom_call.1} parent=0
    _
  %s5 = ssub.s32 1, %s3
  %s6 = scalar_select 0, %s5, %s3
  $region1: #{tpu_custom_call.1} parent=0
    #allocation4 [shape = 'u8[4096]{0}', space=vmem, size = 0x1000, scoped, tag = 'input window, operand 0']
    #allocation5 [shape = 's32[2]{0}', space=sflag, size = 0x8, scoped, tag = 'scoped memory for tpu_custom_call.1']
    #allocation6 [shape = 's32[2]{0}', space=sflag, size = 0x8, scoped, tag = 'scoped memory for tpu_custom_call.1']
    #allocation7 [shape = 'u8[4096]{0}', space=vmem, size = 0x1000, scoped, tag = 'input window, operand 1']
    #allocation8 [shape = 's32[2]{0}', space=sflag, size = 0x8, scoped, tag = 'scoped memory for tpu_custom_call.1']
    #allocation9 [shape = 'u8[8192]{0}', space=vmem, size = 0x2000, scoped, tag = 'output window, operand 0']
    %7 = vsyncpa [#allocation5], 0
    %s8 = scalar_lea.sflag [#allocation5], 1
    %9 = vsyncpa %s8, 0
    %10 = vsyncpa [#allocation8], 0
    %s11 = scalar_lea.sflag [#allocation8], 1
    %12 = vsyncpa %s11, 0
    %13 = vsyncpa [#allocation6], 0
    %s14 = scalar_lea.sflag [#allocation6], 1
    %15 = vsyncpa %s14, 0
    loop: start=0, step=1, limit=4
    $region2: #{tpu_custom_call.1} parent=1 // loop_pre_header
      _
    $region3: #{tpu_custom_call.1} parent=1 // loop_header
      %s17 = sphi 0, %s21
      %p18 = scmp.ge.s32.totalorder %s17, 4
      %s24 = sphi 0, %s36
      %s25 = sphi 0, %s32
      %s26 = sphi 0, %s24
      %s27 = sphi 0, %s25
      %s28 = sphi 0, %s26
      %s29 = sphi 0, %s27
      %s41 = sphi 0, %s43
      %s44 = sphi 0, %s41
      %s45 = sphi 0, %s44
      %s61 = sphi 0, %s45
      %s69 = sphi 0, %s71
      %s72 = sphi 0, %s69
      %s73 = sphi 0, %s72
      %s89 = sphi 0, %s73
      %s95 = sphi 0, %s97
      %s98 = sphi 0, %s95
      %s99 = sphi 0, %s98
      %s115 = sphi 0, %s99
    $region4: #{tpu_custom_call.1} parent=1 // loop_header_branch
      %20 = sbr.rel (%p18) target = $region8
    $region5: #{tpu_custom_call.1} parent=1 // loop_body
      %s22 = ssub.s32 %s17, 1
      %s23 = ssub.s32 %s17, 2
      %s30 = sadd.s32 1, %s25
      %p31 = scmp.ge.s32.totalorder %s30, 1
      %s32 = scalar_select %p31, 0, %s30
      %s33 = sadd.s32 1, %s24
      %s34 = scalar_select %p31, %s33, %s24
      %p35 = scmp.ge.s32.totalorder %s34, 2
      %s36 = scalar_select %p35, 0, %s34
      %s37 = ssub.s32 %s24, %s36
      %s38 = ssub.s32 %s25, %s32
      %s39 = sor.u32 %s37, %s38
      %p40 = scmp.eq.s32.totalorder %s39, 0
      %s42 = sadd.s32 %s41, 1
      %s43 = scalar_select %p40, %s41, %s42
      %p46 = pneg %p40
      %p47 = scmp.eq.s32.totalorder %s17, 1
      %p48 = por %p46, %p47
      %p49 = scmp.ne.s32.totalorder %s41, %s44
      %p50 = scmp.eq.s32.totalorder %s17, 0
      %p51 = por %p49, %p50
      %p52 = scmp.ne.s32.totalorder %s41, %s44
      %p53 = scmp.eq.s32.totalorder %s22, 1
      %p54 = por %p52, %p53
      %p55 = scmp.ne.s32.totalorder %s44, %s45
      %p56 = scmp.eq.s32.totalorder %s22, 0
      %p57 = por %p55, %p56
      %p58 = scmp.ne.s32.totalorder %s44, %s45
      %p59 = scmp.eq.s32.totalorder %s23, 1
      %p60 = por %p58, %p59
      %p62 = scmp.ne.s32.totalorder %s45, %s61
      %p63 = scmp.eq.s32.totalorder %s23, 0
      %p64 = por %p62, %p63
      %s65 = ssub.s32 %s24, %s36
      %s66 = ssub.s32 %s25, %s32
      %s67 = sor.u32 %s65, %s66
      %p68 = scmp.eq.s32.totalorder %s67, 0
      %s70 = sadd.s32 %s69, 1
      %s71 = scalar_select %p68, %s69, %s70
      %p74 = pneg %p68
      %p75 = scmp.eq.s32.totalorder %s17, 1
      %p76 = por %p74, %p75
      %p77 = scmp.ne.s32.totalorder %s69, %s72
      %p78 = scmp.eq.s32.totalorder %s17, 0
      %p79 = por %p77, %p78
      %p80 = scmp.ne.s32.totalorder %s69, %s72
      %p81 = scmp.eq.s32.totalorder %s22, 1
      %p82 = por %p80, %p81
      %p83 = scmp.ne.s32.totalorder %s72, %s73
      %p84 = scmp.eq.s32.totalorder %s22, 0
      %p85 = por %p83, %p84
      %p86 = scmp.ne.s32.totalorder %s72, %s73
      %p87 = scmp.eq.s32.totalorder %s23, 1
      %p88 = por %p86, %p87
      %p90 = scmp.ne.s32.totalorder %s73, %s89
      %p91 = scmp.eq.s32.totalorder %s23, 0
      %p92 = por %p90, %p91
      %s93 = ssub.s32 %s24, %s36
      %p94 = scmp.eq.s32.totalorder %s93, 0
      %s96 = sadd.s32 %s95, 1
      %s97 = scalar_select %p94, %s95, %s96
      %p100 = pneg %p94
      %p101 = scmp.eq.s32.totalorder %s17, 1
      %p102 = por %p100, %p101
      %p103 = scmp.ne.s32.totalorder %s95, %s98
      %p104 = scmp.eq.s32.totalorder %s17, 0
      %p105 = por %p103, %p104
      %p106 = scmp.ne.s32.totalorder %s95, %s98
      %p107 = scmp.eq.s32.totalorder %s22, 1
      %p108 = por %p106, %p107
      %p109 = scmp.ne.s32.totalorder %s98, %s99
      %p110 = scmp.eq.s32.totalorder %s22, 0
      %p111 = por %p109, %p110
      %p112 = scmp.ne.s32.totalorder %s98, %s99
      %p113 = scmp.eq.s32.totalorder %s23, 1
      %p114 = por %p112, %p113
      %p116 = scmp.ne.s32.totalorder %s99, %s115
      %p117 = scmp.eq.s32.totalorder %s23, 0
      %p118 = por %p116, %p117
      %p119 = scmp.le.s32.totalorder 1, %s17
      %p120 = scmp.lt.s32.totalorder %s17, 3
      %p121 = pnand %p119, %p120
      %p122 = pneg %p121
      // Predicated region
      $region9: #{tpu_custom_call.1} parent=5 // pred_check
        _
      $region10: #{tpu_custom_call.1} parent=5 // pred_check_branch
        %124 = sbr.rel (%p121) target = $region12
      $region11: #{tpu_custom_call.1} parent=5 // pred_region
        %s125 = ssub.s32 %s17, 1
      $region12: #{tpu_custom_call.1} parent=5 // pred_fallthru
        _
      %p126 = scmp.lt.s32.totalorder %s17, 2
      // Predicated region
      $region13: #{tpu_custom_call.1} parent=5 // pred_check
        %p127 = pneg %p126
      $region14: #{tpu_custom_call.1} parent=5 // pred_check_branch
        %129 = sbr.rel (%p127) target = $region16
      $region15: #{tpu_custom_call.1} parent=5 // pred_region
        // Predicated region
        $region17: #{tpu_custom_call.1} parent=15 // pred_check
          %p130 = pneg %p51
        $region18: #{tpu_custom_call.1} parent=15 // pred_check_branch
          %132 = sbr.rel (%p130) target = $region20
        $region19: #{tpu_custom_call.1} parent=15 // pred_region
          %s133 = sand.u32 %s41, 1
          %s134 = scalar_lea.sflag [#allocation5], %s133
          %s135 = sand.u32 %s41, 1
          %s136 = smul.addr %s135, 4
          %s137 = scalar_lea.vmem [#allocation4], %s136
          %s139 = ssub.s32 64, 64
          %140 = vsyncadd %s134, %s139
          %s141 = sadd.s32 %s25, %s24
          %s142 = smul.addr %s141, 64
          %s143 = scalar_lea.hbm %s0, %s142
          %s145 = sshll.u32 %s137, 4
          %s146 = int_to_ptr.vmem [resolvable:$true] %s145
          %148 = dma.hbm_to_vmem [thread:$0]  %s143, 64, %s146, %s134
        $region20: #{tpu_custom_call.1} parent=15 // pred_fallthru
          _
        // Predicated region
        $region21: #{tpu_custom_call.1} parent=15 // pred_check
          %p149 = pneg %p79
        $region22: #{tpu_custom_call.1} parent=15 // pred_check_branch
          %151 = sbr.rel (%p149) target = $region24
        $region23: #{tpu_custom_call.1} parent=15 // pred_region
          %s152 = sand.u32 %s69, 1
          %s153 = scalar_lea.sflag [#allocation8], %s152
          %s154 = sand.u32 %s69, 1
          %s155 = smul.addr %s154, 4
          %s156 = scalar_lea.vmem [#allocation7], %s155
          %s158 = ssub.s32 64, 64
          %159 = vsyncadd %s153, %s158
          %s160 = sadd.s32 %s25, %s24
          %s161 = smul.addr %s160, 64
          %s162 = scalar_lea.hbm %s1, %s161
          %s164 = sshll.u32 %s156, 4
          %s165 = int_to_ptr.vmem [resolvable:$true] %s164
          %167 = dma.hbm_to_vmem [thread:$0]  %s162, 64, %s165, %s153
        $region24: #{tpu_custom_call.1} parent=15 // pred_fallthru
          _
      $region16: #{tpu_custom_call.1} parent=5 // pred_fallthru
        _
      %p168 = scmp.le.s32.totalorder 1, %s17
      %p169 = scmp.lt.s32.totalorder %s17, 3
      %p170 = pnand %p168, %p169
      %p171 = pneg %p170
      // Predicated region
      $region25: #{tpu_custom_call.1} parent=5 // pred_check
        _
      $region26: #{tpu_custom_call.1} parent=5 // pred_check_branch
        %173 = sbr.rel (%p170) target = $region28
      $region27: #{tpu_custom_call.1} parent=5 // pred_region
        %s174 = ssub.s32 %s17, 1
        %s175 = sand.u32 %s44, 1
        %s176 = scalar_lea.sflag [#allocation5], %s175
        %s177 = sand.u32 %s44, 1
        %s178 = smul.addr %s177, 4
        %s179 = scalar_lea.vmem [#allocation4], %s178
        // Predicated region
        $region29: #{tpu_custom_call.1} parent=27 // pred_check
          %p180 = pneg %p57
        $region30: #{tpu_custom_call.1} parent=27 // pred_check_branch
          %182 = sbr.rel (%p180) target = $region32
        $region31: #{tpu_custom_call.1} parent=27 // pred_region
          %183 = dma.done %s176, 64
        $region32: #{tpu_custom_call.1} parent=27 // pred_fallthru
          _
        %s184 = sand.u32 %s72, 1
        %s185 = scalar_lea.sflag [#allocation8], %s184
        %s186 = sand.u32 %s72, 1
        %s187 = smul.addr %s186, 4
        %s188 = scalar_lea.vmem [#allocation7], %s187
        // Predicated region
        $region33: #{tpu_custom_call.1} parent=27 // pred_check
          %p189 = pneg %p85
        $region34: #{tpu_custom_call.1} parent=27 // pred_check_branch
          %191 = sbr.rel (%p189) target = $region36
        $region35: #{tpu_custom_call.1} parent=27 // pred_region
          %192 = dma.done %s185, 64
        $region36: #{tpu_custom_call.1} parent=27 // pred_fallthru
          _
        %s193 = sand.u32 %s44, 1
        %s194 = scalar_lea.sflag [#allocation5], %s193
        %s195 = sand.u32 %s44, 1
        %s196 = smul.addr %s195, 4
        %s197 = scalar_lea.vmem [#allocation4], %s196
        %p198 = pneg %p57
        %p199 = pneg %p54
        %s200 = sand.u32 %s72, 1
        %s201 = scalar_lea.sflag [#allocation8], %s200
        %s202 = sand.u32 %s72, 1
        %s203 = smul.addr %s202, 4
        %s204 = scalar_lea.vmem [#allocation7], %s203
        %p205 = pneg %p85
        %p206 = pneg %p82
        %p207 = pneg %p111
        %p208 = pneg %p108
        %s209 = sand.u32 %s98, 1
        %s210 = scalar_lea.sflag [#allocation6], %s209
        %s211 = sand.u32 %s98, 1
        %s212 = smul.addr %s211, 8
        %s213 = scalar_lea.vmem [#allocation9], %s212
        %p214 = scmp.eq.s32.totalorder %s27, 0
        // Predicated region
        $region37: #{tpu_custom_call.1} parent=27 // pred_check
          %p215 = pneg %p214
        $region38: #{tpu_custom_call.1} parent=27 // pred_check_branch
          %217 = sbr.rel (%p215) target = $region40
        $region39: #{tpu_custom_call.1} parent=27 // pred_region
          %218 = vst [vmem:[#allocation2] sm:$0xff] 0.0
          %219 = vst [vmem:[#allocation3] sm:$0xff] 0.0
        $region40: #{tpu_custom_call.1} parent=27 // pred_fallthru
          _
        %v220 = vld [vmem:[%s179] sm:$0xf]
        %v221 = vunpack.c.l.bf16 %v220
        %v222 = vld [vmem:[%s188] sm:$0xf]
        %v223 = vunpack.c.l.bf16 %v222
        %v224 = vxor.u32 %v221, 2147483648
        %v225 = vmul.f32 %v224, 1.442695
        %v226 = vpow.pop %v225
        %v227 = vadd.f32 %v226, 1.0
        %v228 = vrcp.pop %v227
        %v229 = vmul.f32 1.0, %v228
        %v230 = vld [vmem:[#allocation2] sm:$0xff]
        %v231 = vmul.f32 %v229, %v223
        %v232 = vadd.f32 %v231, 0.0
        %v233 = vadd.f32 %v230, %v232
        %234 = vst [vmem:[#allocation2] sm:$0xff] %v233
        %v235 = vld [vmem:[#allocation3] sm:$0xff]
        %v236 = vadd.f32 %v229, %v223
        %v237 = vadd.f32 %v236, 0.0
        %v238 = vadd.f32 %v235, %v237
        %239 = vst [vmem:[#allocation3] sm:$0xff] %v238
        // Predicated region
        $region41: #{tpu_custom_call.1} parent=27 // pred_check
          %p240 = pneg %p214
        $region42: #{tpu_custom_call.1} parent=27 // pred_check_branch
          %242 = sbr.rel (%p240) target = $region44
        $region43: #{tpu_custom_call.1} parent=27 // pred_region
          %v243 = vld [vmem:[#allocation2] sm:$0xff]
          %244 = vadd.xlane.f32.xlu0 %v243
          %v245 = vpop.xlane.xlu0 %244
          %v246 = vrot.slane %v245, 4
          %v247 = vadd.f32 %v245, %v246
          %v248 = vrot.slane %v247, 2
          %v249 = vadd.f32 %v247, %v248
          %v250 = vrot.slane %v249, 1
          %v251 = vadd.f32 %v249, %v250
          %s252 = vtos %v251
          %v253 = vld [vmem:[#allocation3] sm:$0xff]
          %254 = vadd.xlane.f32.xlu0 %v253
          %v255 = vpop.xlane.xlu0 %254
          %v256 = vrot.slane %v255, 4
          %v257 = vadd.f32 %v255, %v256
          %v258 = vrot.slane %v257, 2
          %v259 = vadd.f32 %v257, %v258
          %v260 = vrot.slane %v259, 1
          %v261 = vadd.f32 %v259, %v260
          %s262 = vtos %v261
          %s263 = sadd.f32 %s252, 1.0
          %s264 = smul.f32 %s263, 2.0
          %s265 = sadd.f32 %s262, 1.0
          %v266 = vstv %s265
          %v267 = vrcp.pop %v266
          %s268 = vtos %v267
          %s269 = smul.f32 %s264, %s268
          %v270 = vstv %s269
          %271 = vst [vmem:[%s213] sm:$0xff] %v270
        $region44: #{tpu_custom_call.1} parent=27 // pred_fallthru
          _
        %s272 = sand.u32 %s98, 1
        %s273 = scalar_lea.sflag [#allocation6], %s272
        %s274 = sand.u32 %s98, 1
        %s275 = smul.addr %s274, 8
        %s276 = scalar_lea.vmem [#allocation9], %s275
        // Predicated region
        $region45: #{tpu_custom_call.1} parent=27 // pred_check
          %p277 = pneg %p108
        $region46: #{tpu_custom_call.1} parent=27 // pred_check_branch
          %279 = sbr.rel (%p277) target = $region48
        $region47: #{tpu_custom_call.1} parent=27 // pred_region
          %s281 = ssub.s32 128, 128
          %282 = vsyncadd %s273, %s281
          %s283 = smul.addr %s26, 128
          %s284 = scalar_lea.hbm %s2, %s283
          %s286 = sshll.u32 %s276, 4
          %s287 = int_to_ptr.vmem [resolvable:$true] %s286
          %289 = dma.vmem_to_hbm [thread:$0]  %s287, 128, %s284, %s273
        $region48: #{tpu_custom_call.1} parent=27 // pred_fallthru
          _
      $region28: #{tpu_custom_call.1} parent=5 // pred_fallthru
        _
      %p290 = scmp.le.s32.totalorder 2, %s17
      // Predicated region
      $region49: #{tpu_custom_call.1} parent=5 // pred_check
        %p291 = pneg %p290
      $region50: #{tpu_custom_call.1} parent=5 // pred_check_branch
        %293 = sbr.rel (%p291) target = $region52
      $region51: #{tpu_custom_call.1} parent=5 // pred_region
        %s294 = ssub.s32 %s17, 2
        // Predicated region
        $region53: #{tpu_custom_call.1} parent=51 // pred_check
          %p295 = pneg %p114
        $region54: #{tpu_custom_call.1} parent=51 // pred_check_branch
          %297 = sbr.rel (%p295) target = $region56
        $region55: #{tpu_custom_call.1} parent=51 // pred_region
          %s298 = sand.u32 %s99, 1
          %s299 = scalar_lea.sflag [#allocation6], %s298
          %s300 = sand.u32 %s99, 1
          %s301 = smul.addr %s300, 8
          %s302 = scalar_lea.vmem [#allocation9], %s301
          %303 = dma.done %s299, 128
        $region56: #{tpu_custom_call.1} parent=51 // pred_fallthru
          _
      $region52: #{tpu_custom_call.1} parent=5 // pred_fallthru
        _
    $region6: #{tpu_custom_call.1} parent=1 // loop_footer
      %s21 = sadd.s32 1, %s17
    $region7: #{tpu_custom_call.1} parent=1 // loop_footer_branch
      %16 = sbr.rel target = $region3
    $region8: #{tpu_custom_call.1} parent=1 // loop_exit
      _
    %304 = vsyncpa [#allocation5], 1
    %s305 = scalar_lea.sflag [#allocation5], 1
    %306 = vsyncpa %s305, 1
    %307 = vsyncpa [#allocation8], 1
    %s308 = scalar_lea.sflag [#allocation8], 1
    %309 = vsyncpa %s308, 1
    %310 = vsyncpa [#allocation6], 1
    %s311 = scalar_lea.sflag [#allocation6], 1
    %312 = vsyncpa %s311, 1

</llo_original>
